<compile_context>
chip_gen: v7x
topology: tpu7x:2x2x1
jax: 0.10.0
libtpu: 0.0.40
codegen_flags: <defaults>
</compile_context>

<pallas_src>
import jax
import jax.numpy as jnp
from jax.experimental import pallas as pl
from jax.experimental.pallas import tpu as pltpu

DROPOUT_P = 0.2
_VMEM_BUDGET_BYTES = 48 * 1024 * 1024   # headroom on v7x (64 MiB physical VMEM)


def _round_up(x, m):
    return (x + m - 1) // m * m


def _decoder_tile_kernel(zi_ref, zj_ref, adj_ref):
    """One (T, T) output tile of sigmoid(z_in @ z_in.T).

    zi_ref : VMEM (T, Dp) bf16 rows of z_in for this tile's LHS (block i)
    zj_ref : VMEM (T, Dp) bf16 rows of z_in for this tile's RHS (block j)
    adj_ref: VMEM (T, T)  output tile
    """
    # Contract on D for both operands: zi @ zj.T without materializing zj.T.
    logits = jax.lax.dot_general(
        zi_ref[...], zj_ref[...],
        dimension_numbers=(((1,), (1,)), ((), ())),
        preferred_element_type=jnp.float32,
    )
    # sigmoid(x) = 0.5 * tanh(0.5 * x) + 0.5  -> single EUP transcendental.
    # TODO(synk): if a profile shows the EUP binding with bf16 output on
    # v6e/v7x, evaluate the tanh in bf16 (keep f32 on v5e: no bf16 EUP).
    adj_ref[...] = (0.5 * jnp.tanh(0.5 * logits) + 0.5).astype(adj_ref.dtype)


def inner_product_decoder(z, *, dropout_p=DROPOUT_P, training=True,
                          rng_key=None, tile=1024, out_dtype=jnp.bfloat16):
    """JAX wrapper reproducing InnerProductDecoder.forward(z).

    NOTE: operands run through the MXU in bf16 (f32 accumulation) and the
    output defaults to bf16; pass out_dtype=jnp.float32 for f32 output.
    """
    n, d = z.shape
    out_dtype = jnp.dtype(out_dtype)

    apply_dropout = bool(training) and float(dropout_p) > 0.0
    if apply_dropout and float(dropout_p) >= 1.0:
        # p == 1 drops everything: z -> 0, adj = sigmoid(0) = 0.5 everywhere.
        return jnp.full((n, n), 0.5, dtype=out_dtype)

    # --- fuse dropout + bf16 cast into a single operand (wrapper side) ------
    if apply_dropout:
        if rng_key is None:
            raise ValueError(
                "inner_product_decoder: rng_key is required when training=True "
                "and dropout_p > 0 (no hidden default key).")
        keep = jax.random.bernoulli(rng_key, 1.0 - dropout_p, z.shape)
        scale = jnp.asarray(1.0 / (1.0 - dropout_p), z.dtype)
        z_in = z * keep.astype(z.dtype) * scale
    else:
        z_in = z
    z_in = z_in.astype(jnp.bfloat16)

    # --- pad N to a multiple of 128 (lane-dense), D to a multiple of 128 ----
    n_pad = _round_up(n, 128)
    d_pad = _round_up(d, 128)
    if (n_pad, d_pad) != (n, d):
        z_in = jnp.pad(z_in, ((0, n_pad - n), (0, d_pad - d)))

    # --- tile selection ------------------------------------------------------
    tile = min(_round_up(max(int(tile), 128), 128), n_pad)
    # Give both v7x TensorCores at least one tile row when N allows it.
    if n_pad >= 256:
        tile = min(tile, _round_up(pl.cdiv(n_pad, 2), 128))

    def _vmem_needed(t):
        # double-buffered output + two double-buffered bf16 operand streams
        return 2 * t * t * out_dtype.itemsize + 2 * 2 * t * d_pad * 2

    while _vmem_needed(tile) > _VMEM_BUDGET_BYTES and tile > 128:
        tile = max(128, _round_up(tile // 2, 128))

    grid = (pl.cdiv(n_pad, tile), pl.cdiv(n_pad, tile))
    vmem_limit = int(min(_vmem_needed(tile) + (8 << 20), 56 << 20))

    lhs_spec = pl.BlockSpec((tile, d_pad), lambda i, j: (i, 0))
    rhs_spec = pl.BlockSpec((tile, d_pad), lambda i, j: (j, 0))
    out_spec = pl.BlockSpec((tile, tile), lambda i, j: (i, j))

    # --- cost hint: LHS is fetched once per grid row, not per (i, j) --------
    bytes_accessed = int(
        grid[0] * tile * d_pad * 2                      # LHS bf16, once per i
        + grid[0] * grid[1] * tile * d_pad * 2          # RHS bf16, per (i, j)
        + n_pad * n_pad * out_dtype.itemsize            # output writeback
    )
    cost = pl.CostEstimate(
        flops=2 * (grid[0] * tile) * (grid[1] * tile) * d_pad,
        transcendentals=(grid[0] * tile) * (grid[1] * tile),
        bytes_accessed=bytes_accessed,
    )

    adj_pad = pl.pallas_call(
        _decoder_tile_kernel,
        out_shape=jax.ShapeDtypeStruct((n_pad, n_pad), out_dtype),
        grid=grid,
        in_specs=[lhs_spec, rhs_spec],
        out_specs=out_spec,
        compiler_params=pltpu.CompilerParams(
            dimension_semantics=("parallel", "parallel"),
            vmem_limit_bytes=vmem_limit,
        ),
        cost_estimate=cost,
    )(z_in, z_in)

    return adj_pad[:n, :n]


if __name__ == "__main__":
    key = jax.random.PRNGKey(0)
    # N not a multiple of 128 and D < 128 to exercise the padding paths.
    N, D = 200, 64
    z = jax.random.normal(key, (N, D), dtype=jnp.float32)

    # --- eval mode (dropout disabled) --------------------------------------
    adj_eval = jax.block_until_ready(inner_product_decoder(z, training=False))
    assert adj_eval.shape == (N, N)
    z_bf = z.astype(jnp.bfloat16)
    ref_eval = jax.nn.sigmoid(
        jnp.dot(z_bf, z_bf.T, preferred_element_type=jnp.float32))
    assert jnp.allclose(adj_eval.astype(jnp.float32), ref_eval,
                        atol=4e-3, rtol=4e-3), "eval-mode mismatch"

    # --- training mode (dropout active, explicit rng_key required) ---------
    drop_key = jax.random.PRNGKey(42)
    adj_train = jax.block_until_ready(
        inner_product_decoder(z, training=True, rng_key=drop_key))
    assert adj_train.shape == (N, N)
    adj_train_f32 = adj_train.astype(jnp.float32)
    assert bool(jnp.all((adj_train_f32 >= 0.0) & (adj_train_f32 <= 1.0)))
    # Same z_in rows feed LHS and RHS tiles -> adjacency stays symmetric.
    assert jnp.allclose(adj_train_f32, adj_train_f32.T, atol=4e-3, rtol=4e-3)
    # Full reference using the identical dropout mask and bf16 fusion.
    keep = jax.random.bernoulli(drop_key, 1.0 - DROPOUT_P, z.shape)
    mask_ref = keep.astype(z.dtype) * jnp.asarray(1.0 / (1.0 - DROPOUT_P), z.dtype)
    z_drop = (z * mask_ref).astype(jnp.bfloat16)
    ref_train = jax.nn.sigmoid(
        jnp.dot(z_drop, z_drop.T, preferred_element_type=jnp.float32))
    assert jnp.allclose(adj_train_f32, ref_train,
                        atol=4e-3, rtol=4e-3), "train-mode mismatch"

    # --- f32 output path (matches the PyTorch module's output dtype) -------
    adj_f32 = jax.block_until_ready(
        inner_product_decoder(z, training=False, out_dtype=jnp.float32))
    assert adj_f32.dtype == jnp.float32
    assert jnp.allclose(adj_f32, ref_eval, atol=2e-3, rtol=2e-3)

    print("KERNEL_OK")
</pallas_src>

<mosaic_0001>
module attributes {stable_mosaic.version = 11 : i64} {
  func.func @_decoder_tile_kernel(%arg0: i32, %arg1: i32, %arg2: memref<128x128xbf16, #tpu.memory_space<vmem>>, %arg3: memref<128x128xbf16, #tpu.memory_space<vmem>>, %arg4: memref<128x128xbf16, #tpu.memory_space<vmem>>) attributes {dimension_semantics = [#tpu.dimension_semantics<parallel>, #tpu.dimension_semantics<parallel>], iteration_bounds = array<i64: 2, 2>, scalar_prefetch = 0 : i64, scratch_operands = 0 : i64, tpu.core_type = #tpu.core_type<tc>, window_params = [{transform_indices = @transform_0, window_bounds = array<i64: 128, 128>}, {transform_indices = @transform_1, window_bounds = array<i64: 128, 128>}, {transform_indices = @transform_2, window_bounds = array<i64: 128, 128>}]} {
    %c0 = arith.constant 0 : index
    %c0_0 = arith.constant 0 : index
    %0 = vector.load %arg2[%c0, %c0_0] : memref<128x128xbf16, #tpu.memory_space<vmem>>, vector<128x128xbf16>
    %c0_1 = arith.constant 0 : index
    %c0_2 = arith.constant 0 : index
    %1 = vector.load %arg3[%c0_1, %c0_2] : memref<128x128xbf16, #tpu.memory_space<vmem>>, vector<128x128xbf16>
    %cst = arith.constant dense<0.000000e+00> : vector<128x128xf32>
    %2 = tpu.matmul %0, %1, %cst {dimension_numbers = #tpu.dot_dimension_numbers<[1], [1], [0], [0], [0, 0, 1, 0], [], []>} : vector<128x128xbf16>, vector<128x128xbf16>, vector<128x128xf32> -> vector<128x128xf32>
    %cst_3 = arith.constant 5.000000e-01 : f32
    %3 = vector.broadcast %cst_3 : f32 to vector<128x128xf32>
    %4 = arith.mulf %3, %2 : vector<128x128xf32>
    %5 = math.tanh %4 : vector<128x128xf32>
    %cst_4 = arith.constant 5.000000e-01 : f32
    %6 = vector.broadcast %cst_4 : f32 to vector<128x128xf32>
    %7 = arith.mulf %6, %5 : vector<128x128xf32>
    %cst_5 = arith.constant 5.000000e-01 : f32
    %8 = vector.broadcast %cst_5 : f32 to vector<128x128xf32>
    %9 = arith.addf %7, %8 : vector<128x128xf32>
    %10 = arith.truncf %9 : vector<128x128xf32> to vector<128x128xbf16>
    %c0_6 = arith.constant 0 : index
    %c0_7 = arith.constant 0 : index
    %11 = vector.load %arg4[%c0_6, %c0_7] : memref<128x128xbf16, #tpu.memory_space<vmem>>, vector<128x128xbf16>
    tpu.vector_store %arg4[%c0_6, %c0_7], %10 {strides = array<i32>} : memref<128x128xbf16, #tpu.memory_space<vmem>>, vector<128x128xbf16>,
    return
  }
  func.func @transform_0(%arg0: i32, %arg1: i32) -> (i32, i32) {
    %c0_i32 = arith.constant 0 : i32
    %c0_i32_0 = arith.constant 0 : i32
    return %arg0, %c0_i32 : i32, i32
  }
  func.func @transform_1(%arg0: i32, %arg1: i32) -> (i32, i32) {
    %c0_i32 = arith.constant 0 : i32
    %c0_i32_0 = arith.constant 0 : i32
    return %arg1, %c0_i32 : i32, i32
  }
  func.func @transform_2(%arg0: i32, %arg1: i32) -> (i32, i32) {
    %c0_i32 = arith.constant 0 : i32
    return %arg0, %arg1 : i32, i32
  }
}

</mosaic_0001>

<llo_original>
// kernel: tpu_custom_call.1
$region0: #{tpu_custom_call.1}
  #allocation0 [shape = 'u32[]', space=smem, size = 0x4, offset = 0x4, fixed_abs, tag = 'smem constant byte address 0x4 - core index']
  #allocation1 [shape = 'u32[144,128]{1,0:T(1,128)}', space=vmem, size = 0x12000, scoped, tag = 'internal scratch']
  %s0 = inlined_call_operand.hbm [shape: bf16[256,128], index: 0, kind: input, shape index: {}]
  %s1 = inlined_call_operand.hbm [shape: bf16[256,128], index: 1, kind: input, shape index: {}]
  %s2 = inlined_call_operand.hbm [shape: bf16[256,256], index: 2, kind: output, shape index: {}]
  %s3 = sld [smem:[#allocation0]]
  $region49: #{tpu_custom_call.1} parent=0
    _
  %s5 = ssub.s32 1, %s3
  %s6 = scalar_select 0, %s5, %s3
  $region1: #{tpu_custom_call.1} parent=0
    #allocation2 [shape = 'u8[65536]{0}', space=vmem, size = 0x10000, scoped, tag = 'input window, operand 0']
    #allocation3 [shape = 's32[2]{0}', space=sflag, size = 0x8, scoped, tag = 'scoped memory for tpu_custom_call.1']
    #allocation4 [shape = 's32[2]{0}', space=sflag, size = 0x8, scoped, tag = 'scoped memory for tpu_custom_call.1']
    #allocation5 [shape = 'u8[65536]{0}', space=vmem, size = 0x10000, scoped, tag = 'input window, operand 1']
    #allocation6 [shape = 's32[2]{0}', space=sflag, size = 0x8, scoped, tag = 'scoped memory for tpu_custom_call.1']
    #allocation7 [shape = 'u8[65536]{0}', space=vmem, size = 0x10000, scoped, tag = 'output window, operand 0']
    %7 = vsyncpa [#allocation3], 0
    %s8 = scalar_lea.sflag [#allocation3], 1
    %9 = vsyncpa %s8, 0
    %10 = vsyncpa [#allocation6], 0
    %s11 = scalar_lea.sflag [#allocation6], 1
    %12 = vsyncpa %s11, 0
    %13 = vsyncpa [#allocation4], 0
    %s14 = scalar_lea.sflag [#allocation4], 1
    %15 = vsyncpa %s14, 0
    loop: start=0, step=1, limit=6
    $region2: #{tpu_custom_call.1} parent=1 // loop_pre_header
      _
    $region3: #{tpu_custom_call.1} parent=1 // loop_header
      %s17 = sphi 0, %s21
      %p18 = scmp.ge.s32.totalorder %s17, 6
      %s24 = sphi 0, %s36
      %s25 = sphi 0, %s32
      %s26 = sphi 0, %s24
      %s27 = sphi 0, %s25
      %s28 = sphi 0, %s26
      %s29 = sphi 0, %s27
      %s39 = sphi 0, %s41
      %s42 = sphi 0, %s39
      %s43 = sphi 0, %s42
      %s59 = sphi 0, %s43
      %s65 = sphi 0, %s67
      %s68 = sphi 0, %s65
      %s69 = sphi 0, %s68
      %s85 = sphi 0, %s69
      %s93 = sphi 0, %s95
      %s96 = sphi 0, %s93
      %s97 = sphi 0, %s96
      %s113 = sphi 0, %s97
    $region4: #{tpu_custom_call.1} parent=1 // loop_header_branch
      %20 = sbr.rel (%p18) target = $region8
    $region5: #{tpu_custom_call.1} parent=1 // loop_body
      %s22 = ssub.s32 %s17, 1
      %s23 = ssub.s32 %s17, 2
      %s30 = sadd.s32 1, %s25
      %p31 = scmp.ge.s32.totalorder %s30, 2
      %s32 = scalar_select %p31, 0, %s30
      %s33 = sadd.s32 1, %s24
      %s34 = scalar_select %p31, %s33, %s24
      %p35 = scmp.ge.s32.totalorder %s34, 2
      %s36 = scalar_select %p35, 0, %s34
      %s37 = ssub.s32 %s24, %s36
      %p38 = scmp.eq.s32.totalorder %s37, 0
      %s40 = sadd.s32 %s39, 1
      %s41 = scalar_select %p38, %s39, %s40
      %p44 = pneg %p38
      %p45 = scmp.eq.s32.totalorder %s17, 3
      %p46 = por %p44, %p45
      %p47 = scmp.ne.s32.totalorder %s39, %s42
      %p48 = scmp.eq.s32.totalorder %s17, 0
      %p49 = por %p47, %p48
      %p50 = scmp.ne.s32.totalorder %s39, %s42
      %p51 = scmp.eq.s32.totalorder %s22, 3
      %p52 = por %p50, %p51
      %p53 = scmp.ne.s32.totalorder %s42, %s43
      %p54 = scmp.eq.s32.totalorder %s22, 0
      %p55 = por %p53, %p54
      %p56 = scmp.ne.s32.totalorder %s42, %s43
      %p57 = scmp.eq.s32.totalorder %s23, 3
      %p58 = por %p56, %p57
      %p60 = scmp.ne.s32.totalorder %s43, %s59
      %p61 = scmp.eq.s32.totalorder %s23, 0
      %p62 = por %p60, %p61
      %s63 = ssub.s32 %s25, %s32
      %p64 = scmp.eq.s32.totalorder %s63, 0
      %s66 = sadd.s32 %s65, 1
      %s67 = scalar_select %p64, %s65, %s66
      %p70 = pneg %p64
      %p71 = scmp.eq.s32.totalorder %s17, 3
      %p72 = por %p70, %p71
      %p73 = scmp.ne.s32.totalorder %s65, %s68
      %p74 = scmp.eq.s32.totalorder %s17, 0
      %p75 = por %p73, %p74
      %p76 = scmp.ne.s32.totalorder %s65, %s68
      %p77 = scmp.eq.s32.totalorder %s22, 3
      %p78 = por %p76, %p77
      %p79 = scmp.ne.s32.totalorder %s68, %s69
      %p80 = scmp.eq.s32.totalorder %s22, 0
      %p81 = por %p79, %p80
      %p82 = scmp.ne.s32.totalorder %s68, %s69
      %p83 = scmp.eq.s32.totalorder %s23, 3
      %p84 = por %p82, %p83
      %p86 = scmp.ne.s32.totalorder %s69, %s85
      %p87 = scmp.eq.s32.totalorder %s23, 0
      %p88 = por %p86, %p87
      %s89 = ssub.s32 %s24, %s36
      %s90 = ssub.s32 %s25, %s32
      %s91 = sor.u32 %s89, %s90
      %p92 = scmp.eq.s32.totalorder %s91, 0
      %s94 = sadd.s32 %s93, 1
      %s95 = scalar_select %p92, %s93, %s94
      %p98 = pneg %p92
      %p99 = scmp.eq.s32.totalorder %s17, 3
      %p100 = por %p98, %p99
      %p101 = scmp.ne.s32.totalorder %s93, %s96
      %p102 = scmp.eq.s32.totalorder %s17, 0
      %p103 = por %p101, %p102
      %p104 = scmp.ne.s32.totalorder %s93, %s96
      %p105 = scmp.eq.s32.totalorder %s22, 3
      %p106 = por %p104, %p105
      %p107 = scmp.ne.s32.totalorder %s96, %s97
      %p108 = scmp.eq.s32.totalorder %s22, 0
      %p109 = por %p107, %p108
      %p110 = scmp.ne.s32.totalorder %s96, %s97
      %p111 = scmp.eq.s32.totalorder %s23, 3
      %p112 = por %p110, %p111
      %p114 = scmp.ne.s32.totalorder %s97, %s113
      %p115 = scmp.eq.s32.totalorder %s23, 0
      %p116 = por %p114, %p115
      %p117 = scmp.le.s32.totalorder 1, %s17
      %p118 = scmp.lt.s32.totalorder %s17, 5
      %p119 = pnand %p117, %p118
      %p120 = pneg %p119
      // Predicated region
      $region9: #{tpu_custom_call.1} parent=5 // pred_check
        _
      $region10: #{tpu_custom_call.1} parent=5 // pred_check_branch
        %122 = sbr.rel (%p119) target = $region12
      $region11: #{tpu_custom_call.1} parent=5 // pred_region
        %s123 = ssub.s32 %s17, 1
      $region12: #{tpu_custom_call.1} parent=5 // pred_fallthru
        _
      %p124 = scmp.lt.s32.totalorder %s17, 4
      // Predicated region
      $region13: #{tpu_custom_call.1} parent=5 // pred_check
        %p125 = pneg %p124
      $region14: #{tpu_custom_call.1} parent=5 // pred_check_branch
        %127 = sbr.rel (%p125) target = $region16
      $region15: #{tpu_custom_call.1} parent=5 // pred_region
        // Predicated region
        $region17: #{tpu_custom_call.1} parent=15 // pred_check
          %p128 = pneg %p49
        $region18: #{tpu_custom_call.1} parent=15 // pred_check_branch
          %130 = sbr.rel (%p128) target = $region20
        $region19: #{tpu_custom_call.1} parent=15 // pred_region
          %s131 = sand.u32 %s39, 1
          %s132 = scalar_lea.sflag [#allocation3], %s131
          %s133 = sand.u32 %s39, 1
          %s134 = smul.addr %s133, 64
          %s135 = scalar_lea.vmem [#allocation2], %s134
          %s136 = smul.u32 16, %s24
          %s138 = ssub.s32 1024, 1024
          %139 = vsyncadd %s132, %s138
          %s140 = smul.addr %s136, 64
          %s141 = scalar_lea.hbm %s0, %s140
          %s142 = sshll.u32 %s135, 4
          %s143 = int_to_ptr.vmem [resolvable:$true] %s142
          %148 = dma.hbm_to_vmem [thread:$0]  %s141, 1024, %s143, %s132, 64, 64, 4
        $region20: #{tpu_custom_call.1} parent=15 // pred_fallthru
          _
        // Predicated region
        $region21: #{tpu_custom_call.1} parent=15 // pred_check
          %p149 = pneg %p75
        $region22: #{tpu_custom_call.1} parent=15 // pred_check_branch
          %151 = sbr.rel (%p149) target = $region24
        $region23: #{tpu_custom_call.1} parent=15 // pred_region
          %s152 = sand.u32 %s65, 1
          %s153 = scalar_lea.sflag [#allocation6], %s152
          %s154 = sand.u32 %s65, 1
          %s155 = smul.addr %s154, 64
          %s156 = scalar_lea.vmem [#allocation5], %s155
          %s157 = smul.u32 16, %s25
          %s159 = ssub.s32 1024, 1024
          %160 = vsyncadd %s153, %s159
          %s161 = smul.addr %s157, 64
          %s162 = scalar_lea.hbm %s1, %s161
          %s163 = sshll.u32 %s156, 4
          %s164 = int_to_ptr.vmem [resolvable:$true] %s163
          %169 = dma.hbm_to_vmem [thread:$0]  %s162, 1024, %s164, %s153, 64, 64, 4
        $region24: #{tpu_custom_call.1} parent=15 // pred_fallthru
          _
      $region16: #{tpu_custom_call.1} parent=5 // pred_fallthru
        _
      %p170 = scmp.le.s32.totalorder 1, %s17
      %p171 = scmp.lt.s32.totalorder %s17, 5
      %p172 = pnand %p170, %p171
      %p173 = pneg %p172
      // Predicated region
      $region25: #{tpu_custom_call.1} parent=5 // pred_check
        _
      $region26: #{tpu_custom_call.1} parent=5 // pred_check_branch
        %175 = sbr.rel (%p172) target = $region28
      $region27: #{tpu_custom_call.1} parent=5 // pred_region
        %s176 = ssub.s32 %s17, 1
        %s177 = sand.u32 %s42, 1
        %s178 = scalar_lea.sflag [#allocation3], %s177
        %s179 = sand.u32 %s42, 1
        %s180 = smul.addr %s179, 64
        %s181 = scalar_lea.vmem [#allocation2], %s180
        // Predicated region
        $region29: #{tpu_custom_call.1} parent=27 // pred_check
          %p182 = pneg %p55
        $region30: #{tpu_custom_call.1} parent=27 // pred_check_branch
          %184 = sbr.rel (%p182) target = $region32
        $region31: #{tpu_custom_call.1} parent=27 // pred_region
          %185 = dma.done %s178, 1024
        $region32: #{tpu_custom_call.1} parent=27 // pred_fallthru
          _
        %s186 = sand.u32 %s68, 1
        %s187 = scalar_lea.sflag [#allocation6], %s186
        %s188 = sand.u32 %s68, 1
        %s189 = smul.addr %s188, 64
        %s190 = scalar_lea.vmem [#allocation5], %s189
        // Predicated region
        $region33: #{tpu_custom_call.1} parent=27 // pred_check
          %p191 = pneg %p81
        $region34: #{tpu_custom_call.1} parent=27 // pred_check_branch
          %193 = sbr.rel (%p191) target = $region36
        $region35: #{tpu_custom_call.1} parent=27 // pred_region
          %194 = dma.done %s187, 1024
        $region36: #{tpu_custom_call.1} parent=27 // pred_fallthru
          _
        %s195 = sand.u32 %s42, 1
        %s196 = scalar_lea.sflag [#allocation3], %s195
        %s197 = sand.u32 %s42, 1
        %s198 = smul.addr %s197, 64
        %s199 = scalar_lea.vmem [#allocation2], %s198
        %p200 = pneg %p55
        %p201 = pneg %p52
        %s202 = sand.u32 %s68, 1
        %s203 = scalar_lea.sflag [#allocation6], %s202
        %s204 = sand.u32 %s68, 1
        %s205 = smul.addr %s204, 64
        %s206 = scalar_lea.vmem [#allocation5], %s205
        %p207 = pneg %p81
        %p208 = pneg %p78
        %p209 = pneg %p109
        %p210 = pneg %p106
        %s211 = sand.u32 %s96, 1
        %s212 = scalar_lea.sflag [#allocation4], %s211
        %s213 = sand.u32 %s96, 1
        %s214 = smul.addr %s213, 64
        %s215 = scalar_lea.vmem [#allocation7], %s214
        %s216 = smul.u32 16, %s26
        %s217 = smul.u32 16, %s27
        %s218 = smul.u32 16, %s26
        %v220 = vld [vmem:[%s181] sm:$0xf]
        %v221 = vld [vmem:[%s181 + $0x4] sm:$0xf]
        %v222 = vld [vmem:[%s181 + $0x8] sm:$0xf]
        %v223 = vld [vmem:[%s181 + $0xc] sm:$0xf]
        %v224 = vld [vmem:[%s181 + $0x10] sm:$0xf]
        %v225 = vld [vmem:[%s181 + $0x14] sm:$0xf]
        %v226 = vld [vmem:[%s181 + $0x18] sm:$0xf]
        %v227 = vld [vmem:[%s181 + $0x1c] sm:$0xf]
        %v228 = vld [vmem:[%s181 + $0x20] sm:$0xf]
        %v229 = vld [vmem:[%s181 + $0x24] sm:$0xf]
        %v230 = vld [vmem:[%s181 + $0x28] sm:$0xf]
        %v231 = vld [vmem:[%s181 + $0x2c] sm:$0xf]
        %v232 = vld [vmem:[%s181 + $0x30] sm:$0xf]
        %v233 = vld [vmem:[%s181 + $0x34] sm:$0xf]
        %v234 = vld [vmem:[%s181 + $0x38] sm:$0xf]
        %v235 = vld [vmem:[%s181 + $0x3c] sm:$0xf]
        %v236 = vld [vmem:[%s190] sm:$0xf]
        %v237 = vld [vmem:[%s190 + $0x4] sm:$0xf]
        %v238 = vld [vmem:[%s190 + $0x8] sm:$0xf]
        %v239 = vld [vmem:[%s190 + $0xc] sm:$0xf]
        %v240 = vld [vmem:[%s190 + $0x10] sm:$0xf]
        %v241 = vld [vmem:[%s190 + $0x14] sm:$0xf]
        %v242 = vld [vmem:[%s190 + $0x18] sm:$0xf]
        %v243 = vld [vmem:[%s190 + $0x1c] sm:$0xf]
        %v244 = vld [vmem:[%s190 + $0x20] sm:$0xf]
        %v245 = vld [vmem:[%s190 + $0x24] sm:$0xf]
        %v246 = vld [vmem:[%s190 + $0x28] sm:$0xf]
        %v247 = vld [vmem:[%s190 + $0x2c] sm:$0xf]
        %v248 = vld [vmem:[%s190 + $0x30] sm:$0xf]
        %v249 = vld [vmem:[%s190 + $0x34] sm:$0xf]
        %v250 = vld [vmem:[%s190 + $0x38] sm:$0xf]
        %v251 = vld [vmem:[%s190 + $0x3c] sm:$0xf]
        %v268 = vunpack.c.l.b16 %v220
        %v269 = vunpack.c.l.b16 %v221
        %v270 = vunpack.c.l.b16 %v222
        %v271 = vunpack.c.l.b16 %v223
        %v272 = vunpack.c.l.b16 %v224
        %v273 = vunpack.c.l.b16 %v225
        %v274 = vunpack.c.l.b16 %v226
        %v275 = vunpack.c.l.b16 %v227
        %v276 = vunpack.c.l.b16 %v228
        %v277 = vunpack.c.l.b16 %v229
        %v278 = vunpack.c.l.b16 %v230
        %v279 = vunpack.c.l.b16 %v231
        %v280 = vunpack.c.l.b16 %v232
        %v281 = vunpack.c.l.b16 %v233
        %v282 = vunpack.c.l.b16 %v234
        %v283 = vunpack.c.l.b16 %v235
        %v284 = vpack.c.b16 %v269, %v268
        %v285 = vpack.c.b16 %v271, %v270
        %v286 = vpack.c.b16 %v273, %v272
        %v287 = vpack.c.b16 %v275, %v274
        %v288 = vpack.c.b16 %v277, %v276
        %v289 = vpack.c.b16 %v279, %v278
        %v290 = vpack.c.b16 %v281, %v280
        %v291 = vpack.c.b16 %v283, %v282
        %v316 = vunpack.c.l.b16 %v236
        %v317 = vunpack.c.l.b16 %v237
        %v318 = vunpack.c.l.b16 %v238
        %v319 = vunpack.c.l.b16 %v239
        %v320 = vunpack.c.l.b16 %v240
        %v321 = vunpack.c.l.b16 %v241
        %v322 = vunpack.c.l.b16 %v242
        %v323 = vunpack.c.l.b16 %v243
        %v324 = vunpack.c.l.b16 %v244
        %v325 = vunpack.c.l.b16 %v245
        %v326 = vunpack.c.l.b16 %v246
        %v327 = vunpack.c.l.b16 %v247
        %v328 = vunpack.c.l.b16 %v248
        %v329 = vunpack.c.l.b16 %v249
        %v330 = vunpack.c.l.b16 %v250
        %v331 = vunpack.c.l.b16 %v251
        %v332 = vpack.c.b16 %v317, %v316
        %v333 = vpack.c.b16 %v319, %v318
        %v334 = vpack.c.b16 %v321, %v320
        %v335 = vpack.c.b16 %v323, %v322
        %v336 = vpack.c.b16 %v325, %v324
        %v337 = vpack.c.b16 %v327, %v326
        %v338 = vpack.c.b16 %v329, %v328
        %v339 = vpack.c.b16 %v331, %v330
        %348 = vmatprep.subr.bf16.mxu0 0
        %349 = vmatpush1.bf16.xpose.msra.mxu0 %v332
        %350 = vmatprep.subr.bf16.mxu0 0
        %351 = vmatpush1.bf16.xpose.msra.mxu0 %v333
        %352 = vmatprep.subr.bf16.mxu0 0
        %353 = vmatpush1.bf16.xpose.msra.mxu0 %v334
        %354 = vmatprep.subr.bf16.mxu0 0
        %355 = vmatpush1.bf16.xpose.msra.mxu0 %v335
        %356 = vmatprep.subr.bf16.mxu0 0
        %357 = vmatpush1.bf16.xpose.msra.mxu0 %v336
        %358 = vmatprep.subr.bf16.mxu0 0
        %359 = vmatpush1.bf16.xpose.msra.mxu0 %v337
        %360 = vmatprep.subr.bf16.mxu0 0
        %361 = vmatpush1.bf16.xpose.msra.mxu0 %v338
        %362 = vmatprep.subr.bf16.mxu0 0
        %363 = vmatpush1.bf16.xpose.msra.mxu0 %v339
        %364 = vmatprep.subr.bf16.mxu0 0
        %365 = vmatpush1.bf16.xpose.msra.mxu0 0
        %366 = vmatprep.subr.bf16.mxu0 0
        %367 = vmatpush1.bf16.xpose.msra.mxu0 0
        %368 = vmatprep.subr.bf16.mxu0 0
        %369 = vmatpush1.bf16.xpose.msra.mxu0 0
        %370 = vmatprep.subr.bf16.mxu0 0
        %371 = vmatpush1.bf16.xpose.msra.mxu0 0
        %372 = vmatprep.subr.bf16.mxu0 0
        %373 = vmatpush1.bf16.xpose.msra.mxu0 0
        %374 = vmatprep.subr.bf16.mxu0 0
        %375 = vmatpush1.bf16.xpose.msra.mxu0 0
        %376 = vmatprep.subr.bf16.mxu0 0
        %377 = vmatpush1.bf16.xpose.msra.mxu0 0
        %378 = vmatprep.subr.bf16.mxu0 0
        %379 = vmatpush1.bf16.xpose.msra.mxu0 0
        %380 = vmatprep.mubr.bf16.mxu0 0
        %381 = vmatmul.mubr.bf16.gmra.mrb[0].mxu0 %v284
        %v382 = vpop.f32.mrb[0].mxu0
        %v383 = vadd.f32 0.0, %v382
        %v384 = vpop.f32.mrb[0].mxu0
        %v385 = vpop.f32.mrb[0].mxu0
        %v386 = vadd.f32 0.0, %v385
        %v387 = vpop.f32.mrb[0].mxu0
        %388 = vmatprep.mubr.bf16.mxu0 0
        %389 = vmatmul.mubr.bf16.gmra.mrb[0].mxu0 %v285
        %v390 = vpop.f32.mrb[0].mxu0
        %v391 = vadd.f32 0.0, %v390
        %v392 = vpop.f32.mrb[0].mxu0
        %v393 = vpop.f32.mrb[0].mxu0
        %v394 = vadd.f32 0.0, %v393
        %v395 = vpop.f32.mrb[0].mxu0
        %396 = vmatprep.mubr.bf16.mxu0 0
        %397 = vmatmul.mubr.bf16.gmra.mrb[0].mxu0 %v286
        %v398 = vpop.f32.mrb[0].mxu0
        %v399 = vadd.f32 0.0, %v398
        %v400 = vpop.f32.mrb[0].mxu0
        %v401 = vpop.f32.mrb[0].mxu0
        %v402 = vadd.f32 0.0, %v401
        %v403 = vpop.f32.mrb[0].mxu0
        %404 = vmatprep.mubr.bf16.mxu0 0
        %405 = vmatmul.mubr.bf16.gmra.mrb[0].mxu0 %v287
        %v406 = vpop.f32.mrb[0].mxu0
        %v407 = vadd.f32 0.0, %v406
        %v408 = vpop.f32.mrb[0].mxu0
        %v409 = vpop.f32.mrb[0].mxu0
        %v410 = vadd.f32 0.0, %v409
        %v411 = vpop.f32.mrb[0].mxu0
        %412 = vmatprep.mubr.bf16.mxu0 0
        %413 = vmatmul.mubr.bf16.gmra.mrb[0].mxu0 %v288
        %v414 = vpop.f32.mrb[0].mxu0
        %v415 = vadd.f32 0.0, %v414
        %v416 = vpop.f32.mrb[0].mxu0
        %v417 = vpop.f32.mrb[0].mxu0
        %v418 = vadd.f32 0.0, %v417
        %v419 = vpop.f32.mrb[0].mxu0
        %420 = vmatprep.mubr.bf16.mxu0 0
        %421 = vmatmul.mubr.bf16.gmra.mrb[0].mxu0 %v289
        %v422 = vpop.f32.mrb[0].mxu0
        %v423 = vadd.f32 0.0, %v422
        %v424 = vpop.f32.mrb[0].mxu0
        %v425 = vpop.f32.mrb[0].mxu0
        %v426 = vadd.f32 0.0, %v425
        %v427 = vpop.f32.mrb[0].mxu0
        %428 = vmatprep.mubr.bf16.mxu0 0
        %429 = vmatmul.mubr.bf16.gmra.mrb[0].mxu0 %v290
        %v430 = vpop.f32.mrb[0].mxu0
        %v431 = vadd.f32 0.0, %v430
        %v432 = vpop.f32.mrb[0].mxu0
        %v433 = vpop.f32.mrb[0].mxu0
        %v434 = vadd.f32 0.0, %v433
        %v435 = vpop.f32.mrb[0].mxu0
        %436 = vmatprep.mubr.bf16.mxu0 0
        %437 = vmatmul.mubr.bf16.gmra.mrb[0].mxu0 %v291
        %v438 = vpop.f32.mrb[0].mxu0
        %v439 = vadd.f32 0.0, %v438
        %v440 = vpop.f32.mrb[0].mxu0
        %v441 = vpop.f32.mrb[0].mxu0
        %v442 = vadd.f32 0.0, %v441
        %v443 = vpop.f32.mrb[0].mxu0
        %444 = vdwg.mxu0
        %v445 = vmul.f32 %v383, 0.5
        %v446 = vmul.f32 %v386, 0.5
        %v447 = vmul.f32 %v391, 0.5
        %v448 = vmul.f32 %v394, 0.5
        %v449 = vmul.f32 %v399, 0.5
        %v450 = vmul.f32 %v402, 0.5
        %v451 = vmul.f32 %v407, 0.5
        %v452 = vmul.f32 %v410, 0.5
        %v453 = vmul.f32 %v415, 0.5
        %v454 = vmul.f32 %v418, 0.5
        %v455 = vmul.f32 %v423, 0.5
        %v456 = vmul.f32 %v426, 0.5
        %v457 = vmul.f32 %v431, 0.5
        %v458 = vmul.f32 %v434, 0.5
        %v459 = vmul.f32 %v439, 0.5
        %v460 = vmul.f32 %v442, 0.5
        %v461 = vtanh.pop %v445
        %v462 = vtanh.pop %v446
        %v463 = vtanh.pop %v447
        %v464 = vtanh.pop %v448
        %v465 = vtanh.pop %v449
        %v466 = vtanh.pop %v450
        %v467 = vtanh.pop %v451
        %v468 = vtanh.pop %v452
        %v469 = vtanh.pop %v453
        %v470 = vtanh.pop %v454
        %v471 = vtanh.pop %v455
        %v472 = vtanh.pop %v456
        %v473 = vtanh.pop %v457
        %v474 = vtanh.pop %v458
        %v475 = vtanh.pop %v459
        %v476 = vtanh.pop %v460
        %v477 = vmul.f32 %v461, 0.5
        %v478 = vmul.f32 %v462, 0.5
        %v479 = vmul.f32 %v463, 0.5
        %v480 = vmul.f32 %v464, 0.5
        %v481 = vmul.f32 %v465, 0.5
        %v482 = vmul.f32 %v466, 0.5
        %v483 = vmul.f32 %v467, 0.5
        %v484 = vmul.f32 %v468, 0.5
        %v485 = vmul.f32 %v469, 0.5
        %v486 = vmul.f32 %v470, 0.5
        %v487 = vmul.f32 %v471, 0.5
        %v488 = vmul.f32 %v472, 0.5
        %v489 = vmul.f32 %v473, 0.5
        %v490 = vmul.f32 %v474, 0.5
        %v491 = vmul.f32 %v475, 0.5
        %v492 = vmul.f32 %v476, 0.5
        %v493 = vadd.f32 %v477, 0.5
        %v494 = vadd.f32 %v478, 0.5
        %v495 = vadd.f32 %v479, 0.5
        %v496 = vadd.f32 %v480, 0.5
        %v497 = vadd.f32 %v481, 0.5
        %v498 = vadd.f32 %v482, 0.5
        %v499 = vadd.f32 %v483, 0.5
        %v500 = vadd.f32 %v484, 0.5
        %v501 = vadd.f32 %v485, 0.5
        %v502 = vadd.f32 %v486, 0.5
        %v503 = vadd.f32 %v487, 0.5
        %v504 = vadd.f32 %v488, 0.5
        %v505 = vadd.f32 %v489, 0.5
        %v506 = vadd.f32 %v490, 0.5
        %v507 = vadd.f32 %v491, 0.5
        %v508 = vadd.f32 %v492, 0.5
        %v509 = vpack.c.bf16 %v494, %v493
        %v510 = vpack.c.bf16 %v496, %v495
        %v511 = vpack.c.bf16 %v498, %v497
        %v512 = vpack.c.bf16 %v500, %v499
        %v513 = vpack.c.bf16 %v502, %v501
        %v514 = vpack.c.bf16 %v504, %v503
        %v515 = vpack.c.bf16 %v506, %v505
        %v516 = vpack.c.bf16 %v508, %v507
        %v525 = vunpack.c.l.b16 %v509
        %v526 = vunpack.c.h.b16 %v509
        %v527 = vunpack.c.l.b16 %v510
        %v528 = vunpack.c.h.b16 %v510
        %v529 = vunpack.c.l.b16 %v511
        %v530 = vunpack.c.h.b16 %v511
        %v531 = vunpack.c.l.b16 %v512
        %v532 = vunpack.c.h.b16 %v512
        %v533 = vunpack.c.l.b16 %v513
        %v534 = vunpack.c.h.b16 %v513
        %v535 = vunpack.c.l.b16 %v514
        %v536 = vunpack.c.h.b16 %v514
        %v537 = vunpack.c.l.b16 %v515
        %v538 = vunpack.c.h.b16 %v515
        %v539 = vunpack.c.l.b16 %v516
        %v540 = vunpack.c.h.b16 %v516
        %v541 = vpack.c.b16 %v525, %v525
        %v542 = vpack.c.b16 %v526, %v526
        %v543 = vpack.c.b16 %v527, %v527
        %v544 = vpack.c.b16 %v528, %v528
        %v545 = vpack.c.b16 %v529, %v529
        %v546 = vpack.c.b16 %v530, %v530
        %v547 = vpack.c.b16 %v531, %v531
        %v548 = vpack.c.b16 %v532, %v532
        %v549 = vpack.c.b16 %v533, %v533
        %v550 = vpack.c.b16 %v534, %v534
        %v551 = vpack.c.b16 %v535, %v535
        %v552 = vpack.c.b16 %v536, %v536
        %v553 = vpack.c.b16 %v537, %v537
        %v554 = vpack.c.b16 %v538, %v538
        %v555 = vpack.c.b16 %v539, %v539
        %v556 = vpack.c.b16 %v540, %v540
        %573 = vst [vmem:[%s215] sm:$0xf] %v541
        %574 = vst [vmem:[%s215 + $0x4] sm:$0xf] %v542
        %575 = vst [vmem:[%s215 + $0x8] sm:$0xf] %v543
        %576 = vst [vmem:[%s215 + $0xc] sm:$0xf] %v544
        %577 = vst [vmem:[%s215 + $0x10] sm:$0xf] %v545
        %578 = vst [vmem:[%s215 + $0x14] sm:$0xf] %v546
        %579 = vst [vmem:[%s215 + $0x18] sm:$0xf] %v547
        %580 = vst [vmem:[%s215 + $0x1c] sm:$0xf] %v548
        %581 = vst [vmem:[%s215 + $0x20] sm:$0xf] %v549
        %582 = vst [vmem:[%s215 + $0x24] sm:$0xf] %v550
        %583 = vst [vmem:[%s215 + $0x28] sm:$0xf] %v551
        %584 = vst [vmem:[%s215 + $0x2c] sm:$0xf] %v552
        %585 = vst [vmem:[%s215 + $0x30] sm:$0xf] %v553
        %586 = vst [vmem:[%s215 + $0x34] sm:$0xf] %v554
        %587 = vst [vmem:[%s215 + $0x38] sm:$0xf] %v555
        %588 = vst [vmem:[%s215 + $0x3c] sm:$0xf] %v556
        %s589 = sand.u32 %s96, 1
        %s590 = scalar_lea.sflag [#allocation4], %s589
        %s591 = sand.u32 %s96, 1
        %s592 = smul.addr %s591, 64
        %s593 = scalar_lea.vmem [#allocation7], %s592
        // Predicated region
        $region37: #{tpu_custom_call.1} parent=27 // pred_check
          %p594 = pneg %p106
        $region38: #{tpu_custom_call.1} parent=27 // pred_check_branch
          %596 = sbr.rel (%p594) target = $region40
        $region39: #{tpu_custom_call.1} parent=27 // pred_region
          %s597 = smul.u32 16, %s26
          %s599 = ssub.s32 1024, 1024
          %600 = vsyncadd %s590, %s599
          %s601 = smul.addr %s597, 2
          %s602 = sadd.s32 %s27, %s601
          %s603 = smul.addr %s602, 64
          %s604 = scalar_lea.hbm %s2, %s603
          %s605 = sshll.u32 %s593, 4
          %s606 = int_to_ptr.vmem [resolvable:$true] %s605
          %611 = dma.vmem_to_hbm [thread:$0]  %s606, 1024, %s604, %s590, 64, 128, 4
        $region40: #{tpu_custom_call.1} parent=27 // pred_fallthru
          _
      $region28: #{tpu_custom_call.1} parent=5 // pred_fallthru
        _
      %p612 = scmp.le.s32.totalorder 2, %s17
      // Predicated region
      $region41: #{tpu_custom_call.1} parent=5 // pred_check
        %p613 = pneg %p612
      $region42: #{tpu_custom_call.1} parent=5 // pred_check_branch
        %615 = sbr.rel (%p613) target = $region44
      $region43: #{tpu_custom_call.1} parent=5 // pred_region
        %s616 = ssub.s32 %s17, 2
        // Predicated region
        $region45: #{tpu_custom_call.1} parent=43 // pred_check
          %p617 = pneg %p112
        $region46: #{tpu_custom_call.1} parent=43 // pred_check_branch
          %619 = sbr.rel (%p617) target = $region48
        $region47: #{tpu_custom_call.1} parent=43 // pred_region
          %s620 = sand.u32 %s97, 1
          %s621 = scalar_lea.sflag [#allocation4], %s620
          %s622 = sand.u32 %s97, 1
          %s623 = smul.addr %s622, 64
          %s624 = scalar_lea.vmem [#allocation7], %s623
          %625 = dma.done %s621, 1024
        $region48: #{tpu_custom_call.1} parent=43 // pred_fallthru
          _
      $region44: #{tpu_custom_call.1} parent=5 // pred_fallthru
        _
    $region6: #{tpu_custom_call.1} parent=1 // loop_footer
      %s21 = sadd.s32 1, %s17
    $region7: #{tpu_custom_call.1} parent=1 // loop_footer_branch
      %16 = sbr.rel target = $region3
    $region8: #{tpu_custom_call.1} parent=1 // loop_exit
      _
    %626 = vsyncpa [#allocation3], 1
    %s627 = scalar_lea.sflag [#allocation3], 1
    %628 = vsyncpa %s627, 1
    %629 = vsyncpa [#allocation6], 1
    %s630 = scalar_lea.sflag [#allocation6], 1
    %631 = vsyncpa %s630, 1
    %632 = vsyncpa [#allocation4], 1
    %s633 = scalar_lea.sflag [#allocation4], 1
    %634 = vsyncpa %s633, 1

</llo_original>
